<compile_context>
chip_gen: v6e
topology: v6e:2x2x1
jax: 0.10.0
libtpu: 0.0.40
codegen_flags: <defaults>
</compile_context>

<pallas_src>
import numpy as np
import jax
import jax.numpy as jnp
from jax.experimental import pallas as pl
from jax.experimental.pallas import tpu as pltpu

N = 16
ROWS = N * N * N // 128          # 32
LANES = 128
# Freudenthal 3D forward edge stencil (7 neighbor offsets)
OFFSETS = ((1, 0, 0), (0, 1, 0), (0, 0, 1),
           (1, 1, 0), (1, 0, 1), (0, 1, 1), (1, 1, 1))
NOFF = len(OFFSETS)


# ---------------------------------------------------------------------------
# reference "circle" field (same as the PyTorch script)
# ---------------------------------------------------------------------------
def circlefn(i, j, k, n):
    r = np.sqrt((i - n / 2.0) ** 2 + (j - n / 2.0) ** 2)
    return np.exp(-((r - n / 3.0) ** 2 + (k - n / 2.0) ** 2) / (n * 2))


def gen_circle(n):
    beta = np.empty((n, n, n))
    for i in range(n):
        for j in range(n):
            for k in range(n):
                beta[i, j, k] = circlefn(i, j, k, n)
    return beta


# ---------------------------------------------------------------------------
# Pallas kernel: level-set filtration extension (lower-star edge values)
#   edge value for direction d at vertex u = max(-beta[u], -beta[u + offset_d])
#   neighbor is fetched in-kernel: flat+S  ==  row+R (with carry) , (lane+L) mod 128
# ---------------------------------------------------------------------------
def _filtration_kernel(beta_ref, edge_ref):
    g = -beta_ref[...]                                        # (32,128): sublevel of -beta
    lane = jax.lax.broadcasted_iota(jnp.int32, (ROWS, LANES), 1)

    row_shifted = {0: g}                                      # cache of row-rolled copies of g

    def rows(r):                                              # g shifted by r rows (flat + r*128)
        if r not in row_shifted:
            row_shifted[r] = pltpu.roll(g, shift=ROWS - r, axis=0)
        return row_shifted[r]

    for d, (dx, dy, dz) in enumerate(OFFSETS):                # 7 static directions, unrolled
        R = 2 * dx                                            # flat offset = R*128 + L
        L = dy * N + dz                                       # 0 <= L < 128
        if L == 0:
            nb = rows(R)                                      # pure row shift (dx only)
        else:
            no_carry = pltpu.roll(rows(R), shift=LANES - L, axis=1)
            carried = pltpu.roll(rows(R + 1), shift=LANES - L, axis=1)
            nb = jnp.where(lane + L < LANES, no_carry, carried)
        # Values outside the valid (N-dx)(N-dy)(N-dz) sub-cube are never read by the host,
        # so no mask / inf fill is needed.
        edge_ref[d] = jnp.maximum(g, nb)


def filtration_values(beta):
    """Per-direction edge filtration values max(-beta[u], -beta[v]) as a (7,32,128) slab."""
    beta2d = jnp.asarray(beta, jnp.float32).reshape(ROWS, LANES)
    edge_vals = pl.pallas_call(
        _filtration_kernel,
        grid=(1,),
        in_specs=[pl.BlockSpec((ROWS, LANES), lambda i: (0, 0))],
        out_specs=pl.BlockSpec((NOFF, ROWS, LANES), lambda i: (0, 0, 0)),
        out_shape=jax.ShapeDtypeStruct((NOFF, ROWS, LANES), jnp.float32),
        compiler_params=pltpu.CompilerParams(dimension_semantics=("arbitrary",)),
    )(beta2d)
    return edge_vals


# ---------------------------------------------------------------------------
# host: exact dim-0 persistence (union-find over the 1-skeleton)
# ---------------------------------------------------------------------------
def _h0_superlevel_diagram(g_flat, edges_u, edges_v, edge_vals):
    order = np.argsort(edge_vals, kind="stable")
    n_v = g_flat.shape[0]
    parent = np.arange(n_v)
    birth = g_flat.copy()

    def find(x):
        r = x
        while parent[r] != r:
            r = parent[r]
        while parent[x] != r:
            parent[x], x = r, parent[x]
        return r

    births, deaths = [], []
    for e in order:
        u, v, val = int(edges_u[e]), int(edges_v[e]), float(edge_vals[e])
        ru, rv = find(u), find(v)
        if ru == rv:
            continue                      # edge closes a 1-cycle (H1) -- not tracked here
        if birth[ru] < birth[rv]:
            ru, rv = rv, ru               # younger (larger sublevel birth) component dies
        births.append(float(birth[ru]))
        deaths.append(val)
        parent[ru] = rv
    for i in range(n_v):                  # essential classes
        if find(i) == i:
            births.append(float(birth[i]))
            deaths.append(np.inf)
    births = np.asarray(births, np.float32)
    deaths = np.asarray(deaths, np.float32)
    # convert the sublevel(-beta) diagram back to the superlevel(beta) convention
    return -births, -deaths               # birth >= death; essential death = -inf


# ---------------------------------------------------------------------------
# barcode length sums (SumBarcodeLengths(dim=0) + PartialSumBarcodeLengths(dim=1, skip=1))
# Computed directly on the host: the diagram is host-resident after union-find and the
# reduction is over a few thousand floats — a pallas_call here costs more than it saves.
# ---------------------------------------------------------------------------
def _finite_lengths(births, deaths):
    # superlevel convention: length = birth - death; infinite (death = -inf) bars -> 0
    finite = np.isfinite(deaths)
    return np.where(finite, births.astype(np.float64) - deaths.astype(np.float64), 0.0)


def barcode_loss(dgm0, dgm1):
    len0 = _finite_lengths(*dgm0)
    len1 = _finite_lengths(*dgm1)
    s0 = len0.sum()                                            # SumBarcodeLengths(dim=0)
    s1 = len1.sum() - (len1.max() if len1.size else 0.0)       # skip=1: drop the longest bar
    return jnp.float32(s0 + s1)


# ---------------------------------------------------------------------------
# TopLoss forward
# ---------------------------------------------------------------------------
def top_loss(beta):
    beta = jnp.asarray(beta, jnp.float32)
    edge_vals = filtration_values(beta)                        # Pallas kernel (device)

    beta_np = np.asarray(beta)
    g_flat = (-beta_np).ravel().astype(np.float32)             # host-side negation

    idx = np.arange(N ** 3).reshape(N, N, N)
    ev = np.asarray(edge_vals).reshape(NOFF, N, N, N)
    eu, evv, evals = [], [], []
    for d, (dx, dy, dz) in enumerate(OFFSETS):
        eu.append(idx[:N - dx, :N - dy, :N - dz].ravel())
        evv.append(idx[dx:, dy:, dz:].ravel())
        evals.append(ev[d, :N - dx, :N - dy, :N - dz].ravel())
    eu = np.concatenate(eu)
    evv = np.concatenate(evv)
    evals = np.concatenate(evals)

    dgm0 = _h0_superlevel_diagram(g_flat, eu, evv, evals)
    # TODO(synk): dim-1 persistence (boundary-matrix reduction over triangles) has no clean
    # Pallas equivalent; passing an empty dim-1 diagram (PartialSum contribution = 0).
    dgm1 = (np.zeros((0,), np.float32), np.zeros((0,), np.float32))

    return barcode_loss(dgm0, dgm1)


if __name__ == "__main__":
    beta_np = gen_circle(N).astype(np.float32)
    key = jax.random.PRNGKey(0)
    noise = 0.05 * jax.random.normal(key, (N, N, N), dtype=jnp.float32)
    beta = jnp.asarray(beta_np) + noise          # deterministic "noisy circle" input
    loss = top_loss(beta)
    loss = jax.block_until_ready(loss)
    print("KERNEL_OK")
</pallas_src>

<mosaic_0001>
module attributes {stable_mosaic.version = 11 : i64} {
  func.func @_filtration_kernel(%arg0: i32, %arg1: memref<32x128xf32, #tpu.memory_space<vmem>>, %arg2: memref<7x32x128xf32, #tpu.memory_space<vmem>>) attributes {dimension_semantics = [#tpu.dimension_semantics<arbitrary>], iteration_bounds = array<i64: 1>, scalar_prefetch = 0 : i64, scratch_operands = 0 : i64, tpu.core_type = #tpu.core_type<tc>, window_params = [{pipeline_mode = #tpu.pipeline_mode<synchronous>, transform_indices = @transform_0, window_bounds = array<i64: 32, 128>}, {pipeline_mode = #tpu.pipeline_mode<synchronous>, transform_indices = @transform_1, window_bounds = array<i64: 7, 32, 128>}]} {
    %c0 = arith.constant 0 : index
    %c0_0 = arith.constant 0 : index
    %0 = vector.load %arg1[%c0, %c0_0] : memref<32x128xf32, #tpu.memory_space<vmem>>, vector<32x128xf32>
    %cst = arith.constant 0.000000e+00 : f32
    %1 = vector.broadcast %cst : f32 to vector<32x128xf32>
    %2 = arith.subf %1, %0 : vector<32x128xf32>
    %3 = tpu.iota {dimensions = array<i32: 1>} : vector<32x128xi32>
    %c30_i32 = arith.constant 30 : i32
    %4 = tpu.dynamic_rotate %2 by %c30_i32 dim 0 : vector<32x128xf32>, i32 -> vector<32x128xf32>
    %5 = arith.maximumf %2, %4 : vector<32x128xf32>
    %c0_1 = arith.constant 0 : index
    %c0_2 = arith.constant 0 : index
    %c0_3 = arith.constant 0 : index
    %6 = vector.load %arg2[%c0_1, %c0_2, %c0_3] : memref<7x32x128xf32, #tpu.memory_space<vmem>>, vector<1x32x128xf32>
    %7 = vector.shape_cast %6 : vector<1x32x128xf32> to vector<32x128xf32>
    %8 = vector.shape_cast %5 : vector<32x128xf32> to vector<1x32x128xf32>
    tpu.vector_store %arg2[%c0_1, %c0_2, %c0_3], %8 {strides = array<i32>} : memref<7x32x128xf32, #tpu.memory_space<vmem>>, vector<1x32x128xf32>,
    %c112_i32 = arith.constant 112 : i32
    %9 = tpu.dynamic_rotate %2 by %c112_i32 dim 1 : vector<32x128xf32>, i32 -> vector<32x128xf32>
    %c31_i32 = arith.constant 31 : i32
    %10 = tpu.dynamic_rotate %2 by %c31_i32 dim 0 : vector<32x128xf32>, i32 -> vector<32x128xf32>
    %c112_i32_4 = arith.constant 112 : i32
    %11 = tpu.dynamic_rotate %10 by %c112_i32_4 dim 1 : vector<32x128xf32>, i32 -> vector<32x128xf32>
    %c16_i32 = arith.constant 16 : i32
    %12 = vector.broadcast %c16_i32 : i32 to vector<32x128xi32>
    %13 = arith.addi %3, %12 : vector<32x128xi32>
    %c128_i32 = arith.constant 128 : i32
    %14 = vector.broadcast %c128_i32 : i32 to vector<32x128xi32>
    %15 = arith.cmpi slt, %13, %14 : vector<32x128xi32>
    %16 = arith.select %15, %9, %11 : vector<32x128xi1>, vector<32x128xf32>
    %17 = arith.maximumf %2, %16 : vector<32x128xf32>
    %c1 = arith.constant 1 : index
    %c0_5 = arith.constant 0 : index
    %c0_6 = arith.constant 0 : index
    %18 = vector.load %arg2[%c1, %c0_5, %c0_6] : memref<7x32x128xf32, #tpu.memory_space<vmem>>, vector<1x32x128xf32>
    %19 = vector.shape_cast %18 : vector<1x32x128xf32> to vector<32x128xf32>
    %20 = vector.shape_cast %17 : vector<32x128xf32> to vector<1x32x128xf32>
    tpu.vector_store %arg2[%c1, %c0_5, %c0_6], %20 {strides = array<i32>} : memref<7x32x128xf32, #tpu.memory_space<vmem>>, vector<1x32x128xf32>,
    %c127_i32 = arith.constant 127 : i32
    %21 = tpu.dynamic_rotate %2 by %c127_i32 dim 1 : vector<32x128xf32>, i32 -> vector<32x128xf32>
    %c127_i32_7 = arith.constant 127 : i32
    %22 = tpu.dynamic_rotate %10 by %c127_i32_7 dim 1 : vector<32x128xf32>, i32 -> vector<32x128xf32>
    %c1_i32 = arith.constant 1 : i32
    %23 = vector.broadcast %c1_i32 : i32 to vector<32x128xi32>
    %24 = arith.addi %3, %23 : vector<32x128xi32>
    %c128_i32_8 = arith.constant 128 : i32
    %25 = vector.broadcast %c128_i32_8 : i32 to vector<32x128xi32>
    %26 = arith.cmpi slt, %24, %25 : vector<32x128xi32>
    %27 = arith.select %26, %21, %22 : vector<32x128xi1>, vector<32x128xf32>
    %28 = arith.maximumf %2, %27 : vector<32x128xf32>
    %c2 = arith.constant 2 : index
    %c0_9 = arith.constant 0 : index
    %c0_10 = arith.constant 0 : index
    %29 = vector.load %arg2[%c2, %c0_9, %c0_10] : memref<7x32x128xf32, #tpu.memory_space<vmem>>, vector<1x32x128xf32>
    %30 = vector.shape_cast %29 : vector<1x32x128xf32> to vector<32x128xf32>
    %31 = vector.shape_cast %28 : vector<32x128xf32> to vector<1x32x128xf32>
    tpu.vector_store %arg2[%c2, %c0_9, %c0_10], %31 {strides = array<i32>} : memref<7x32x128xf32, #tpu.memory_space<vmem>>, vector<1x32x128xf32>,
    %c112_i32_11 = arith.constant 112 : i32
    %32 = tpu.dynamic_rotate %4 by %c112_i32_11 dim 1 : vector<32x128xf32>, i32 -> vector<32x128xf32>
    %c29_i32 = arith.constant 29 : i32
    %33 = tpu.dynamic_rotate %2 by %c29_i32 dim 0 : vector<32x128xf32>, i32 -> vector<32x128xf32>
    %c112_i32_12 = arith.constant 112 : i32
    %34 = tpu.dynamic_rotate %33 by %c112_i32_12 dim 1 : vector<32x128xf32>, i32 -> vector<32x128xf32>
    %c16_i32_13 = arith.constant 16 : i32
    %35 = vector.broadcast %c16_i32_13 : i32 to vector<32x128xi32>
    %36 = arith.addi %3, %35 : vector<32x128xi32>
    %c128_i32_14 = arith.constant 128 : i32
    %37 = vector.broadcast %c128_i32_14 : i32 to vector<32x128xi32>
    %38 = arith.cmpi slt, %36, %37 : vector<32x128xi32>
    %39 = arith.select %38, %32, %34 : vector<32x128xi1>, vector<32x128xf32>
    %40 = arith.maximumf %2, %39 : vector<32x128xf32>
    %c3 = arith.constant 3 : index
    %c0_15 = arith.constant 0 : index
    %c0_16 = arith.constant 0 : index
    %41 = vector.load %arg2[%c3, %c0_15, %c0_16] : memref<7x32x128xf32, #tpu.memory_space<vmem>>, vector<1x32x128xf32>
    %42 = vector.shape_cast %41 : vector<1x32x128xf32> to vector<32x128xf32>
    %43 = vector.shape_cast %40 : vector<32x128xf32> to vector<1x32x128xf32>
    tpu.vector_store %arg2[%c3, %c0_15, %c0_16], %43 {strides = array<i32>} : memref<7x32x128xf32, #tpu.memory_space<vmem>>, vector<1x32x128xf32>,
    %c127_i32_17 = arith.constant 127 : i32
    %44 = tpu.dynamic_rotate %4 by %c127_i32_17 dim 1 : vector<32x128xf32>, i32 -> vector<32x128xf32>
    %c127_i32_18 = arith.constant 127 : i32
    %45 = tpu.dynamic_rotate %33 by %c127_i32_18 dim 1 : vector<32x128xf32>, i32 -> vector<32x128xf32>
    %c1_i32_19 = arith.constant 1 : i32
    %46 = vector.broadcast %c1_i32_19 : i32 to vector<32x128xi32>
    %47 = arith.addi %3, %46 : vector<32x128xi32>
    %c128_i32_20 = arith.constant 128 : i32
    %48 = vector.broadcast %c128_i32_20 : i32 to vector<32x128xi32>
    %49 = arith.cmpi slt, %47, %48 : vector<32x128xi32>
    %50 = arith.select %49, %44, %45 : vector<32x128xi1>, vector<32x128xf32>
    %51 = arith.maximumf %2, %50 : vector<32x128xf32>
    %c4 = arith.constant 4 : index
    %c0_21 = arith.constant 0 : index
    %c0_22 = arith.constant 0 : index
    %52 = vector.load %arg2[%c4, %c0_21, %c0_22] : memref<7x32x128xf32, #tpu.memory_space<vmem>>, vector<1x32x128xf32>
    %53 = vector.shape_cast %52 : vector<1x32x128xf32> to vector<32x128xf32>
    %54 = vector.shape_cast %51 : vector<32x128xf32> to vector<1x32x128xf32>
    tpu.vector_store %arg2[%c4, %c0_21, %c0_22], %54 {strides = array<i32>} : memref<7x32x128xf32, #tpu.memory_space<vmem>>, vector<1x32x128xf32>,
    %c111_i32 = arith.constant 111 : i32
    %55 = tpu.dynamic_rotate %2 by %c111_i32 dim 1 : vector<32x128xf32>, i32 -> vector<32x128xf32>
    %c111_i32_23 = arith.constant 111 : i32
    %56 = tpu.dynamic_rotate %10 by %c111_i32_23 dim 1 : vector<32x128xf32>, i32 -> vector<32x128xf32>
    %c17_i32 = arith.constant 17 : i32
    %57 = vector.broadcast %c17_i32 : i32 to vector<32x128xi32>
    %58 = arith.addi %3, %57 : vector<32x128xi32>
    %c128_i32_24 = arith.constant 128 : i32
    %59 = vector.broadcast %c128_i32_24 : i32 to vector<32x128xi32>
    %60 = arith.cmpi slt, %58, %59 : vector<32x128xi32>
    %61 = arith.select %60, %55, %56 : vector<32x128xi1>, vector<32x128xf32>
    %62 = arith.maximumf %2, %61 : vector<32x128xf32>
    %c5 = arith.constant 5 : index
    %c0_25 = arith.constant 0 : index
    %c0_26 = arith.constant 0 : index
    %63 = vector.load %arg2[%c5, %c0_25, %c0_26] : memref<7x32x128xf32, #tpu.memory_space<vmem>>, vector<1x32x128xf32>
    %64 = vector.shape_cast %63 : vector<1x32x128xf32> to vector<32x128xf32>
    %65 = vector.shape_cast %62 : vector<32x128xf32> to vector<1x32x128xf32>
    tpu.vector_store %arg2[%c5, %c0_25, %c0_26], %65 {strides = array<i32>} : memref<7x32x128xf32, #tpu.memory_space<vmem>>, vector<1x32x128xf32>,
    %c111_i32_27 = arith.constant 111 : i32
    %66 = tpu.dynamic_rotate %4 by %c111_i32_27 dim 1 : vector<32x128xf32>, i32 -> vector<32x128xf32>
    %c111_i32_28 = arith.constant 111 : i32
    %67 = tpu.dynamic_rotate %33 by %c111_i32_28 dim 1 : vector<32x128xf32>, i32 -> vector<32x128xf32>
    %c17_i32_29 = arith.constant 17 : i32
    %68 = vector.broadcast %c17_i32_29 : i32 to vector<32x128xi32>
    %69 = arith.addi %3, %68 : vector<32x128xi32>
    %c128_i32_30 = arith.constant 128 : i32
    %70 = vector.broadcast %c128_i32_30 : i32 to vector<32x128xi32>
    %71 = arith.cmpi slt, %69, %70 : vector<32x128xi32>
    %72 = arith.select %71, %66, %67 : vector<32x128xi1>, vector<32x128xf32>
    %73 = arith.maximumf %2, %72 : vector<32x128xf32>
    %c6 = arith.constant 6 : index
    %c0_31 = arith.constant 0 : index
    %c0_32 = arith.constant 0 : index
    %74 = vector.load %arg2[%c6, %c0_31, %c0_32] : memref<7x32x128xf32, #tpu.memory_space<vmem>>, vector<1x32x128xf32>
    %75 = vector.shape_cast %74 : vector<1x32x128xf32> to vector<32x128xf32>
    %76 = vector.shape_cast %73 : vector<32x128xf32> to vector<1x32x128xf32>
    tpu.vector_store %arg2[%c6, %c0_31, %c0_32], %76 {strides = array<i32>} : memref<7x32x128xf32, #tpu.memory_space<vmem>>, vector<1x32x128xf32>,
    return
  }
  func.func @transform_0(%arg0: i32) -> (i32, i32) {
    %c0_i32 = arith.constant 0 : i32
    %c0_i32_0 = arith.constant 0 : i32
    %c0_i32_1 = arith.constant 0 : i32
    return %c0_i32, %c0_i32_0 : i32, i32
  }
  func.func @transform_1(%arg0: i32) -> (i32, i32, i32) {
    %c0_i32 = arith.constant 0 : i32
    %c0_i32_0 = arith.constant 0 : i32
    %c0_i32_1 = arith.constant 0 : i32
    %c0_i32_2 = arith.constant 0 : i32
    return %c0_i32, %c0_i32_0, %c0_i32_1 : i32, i32, i32
  }
}

</mosaic_0001>

<llo_original>
// kernel: tpu_custom_call.1
$region0: #{tpu_custom_call.1}
  #allocation0 [shape = 'u32[]', space=smem, size = 0x4, offset = 0x4, fixed_abs, tag = 'smem constant byte address 0x4 - core index']
  #allocation1 [shape = 'u32[144,128]{1,0:T(1,128)}', space=vmem, size = 0x12000, scoped, tag = 'internal scratch']
  %s0 = inlined_call_operand.hbm [shape: f32[32,128], index: 0, kind: input, shape index: {}]
  %s1 = inlined_call_operand.hbm [shape: f32[7,32,128], index: 1, kind: output, shape index: {}]
  %s2 = sld [smem:[#allocation0]]
  $region18: #{tpu_custom_call.1} parent=0
    _
  %s4 = ssub.s32 1, %s2
  %s5 = scalar_select 0, %s4, %s2
  $region1: #{tpu_custom_call.1} parent=0
    #allocation2 [shape = 'u8[16384]{0}', space=vmem, size = 0x4000, scoped, tag = 'input window, operand 0, single buffered']
    #allocation3 [shape = 's32[1]{0}', space=sflag, size = 0x4, scoped, tag = 'scoped memory for tpu_custom_call.1']
    #allocation4 [shape = 's32[1]{0}', space=sflag, size = 0x4, scoped, tag = 'scoped memory for tpu_custom_call.1']
    #allocation5 [shape = 'u8[114688]{0}', space=vmem, size = 0x1c000, scoped, tag = 'output window, operand 0, single buffered']
    %6 = vsyncpa [#allocation3], 0
    %7 = vsyncpa [#allocation4], 0
    // Predicated region
    $region2: #{tpu_custom_call.1} parent=1 // pred_check
      _
    $region3: #{tpu_custom_call.1} parent=1 // pred_check_branch
      %9 = sbr.rel (0) target = $region5
    $region4: #{tpu_custom_call.1} parent=1 // pred_region
      %s11 = ssub.s32 512, 512
      %12 = vsyncadd [#allocation3], %s11
      %s13 = sshll.u32 [#allocation2], 4
      %s14 = int_to_ptr.vmem [resolvable:$true] %s13
      %19 = dma.hbm_to_vmem [thread:$0]  %s0, 512, %s14, [#allocation3], 128, 128, 8
    $region5: #{tpu_custom_call.1} parent=1 // pred_fallthru
      _
    // Predicated region
    $region6: #{tpu_custom_call.1} parent=1 // pred_check
      _
    $region7: #{tpu_custom_call.1} parent=1 // pred_check_branch
      %21 = sbr.rel (0) target = $region9
    $region8: #{tpu_custom_call.1} parent=1 // pred_region
      %22 = dma.done [#allocation3], 512
    $region9: #{tpu_custom_call.1} parent=1 // pred_fallthru
      _
    %v23 = vld [vmem:[#allocation2] sm:$0xff]
    %v24 = vld [vmem:[#allocation2 + $0x8] sm:$0xff]
    %v25 = vld [vmem:[#allocation2 + $0x10] sm:$0xff]
    %v26 = vld [vmem:[#allocation2 + $0x18] sm:$0xff]
    %v27 = vsub.f32 0.0, %v23
    %v28 = vsub.f32 0.0, %v24
    %v29 = vsub.f32 0.0, %v25
    %v30 = vsub.f32 0.0, %v26
    %v31 = vlaneseq
    %v32 = vand.u32 %v31, 127
    %v33 = vrot.slane %v27, 2
    %v34 = vrot.slane %v28, 2
    %v35 = vrot.slane %v29, 2
    %v36 = vrot.slane %v30, 2
    %v37 = vlaneseq
    %v38 = vshrl.u32 %v37, 7
    %vm39 = vcmp.lt.s32.totalorder %v38, 6
    %v40 = vsel %vm39, %v35, %v36
    %v41 = vsel %vm39, %v34, %v35
    %v42 = vsel %vm39, %v33, %v34
    %v43 = vsel %vm39, %v36, %v33
    %v44 = vmax.f32 %v27, %v42
    %v45 = vmax.f32 %v28, %v41
    %v46 = vmax.f32 %v29, %v40
    %v47 = vmax.f32 %v30, %v43
    %48 = vst [vmem:[#allocation5] sm:$0xff] %v44
    %49 = vst [vmem:[#allocation5 + $0x8] sm:$0xff] %v45
    %50 = vst [vmem:[#allocation5 + $0x10] sm:$0xff] %v46
    %51 = vst [vmem:[#allocation5 + $0x18] sm:$0xff] %v47
    %52 = vrot.lane.b32.xlu0 %v27, 112
    %v53 = vpop.permute.xlu0 %52
    %54 = vrot.lane.b32.xlu0 %v28, 112
    %v55 = vpop.permute.xlu0 %54
    %56 = vrot.lane.b32.xlu0 %v29, 112
    %v57 = vpop.permute.xlu0 %56
    %58 = vrot.lane.b32.xlu0 %v30, 112
    %v59 = vpop.permute.xlu0 %58
    %v60 = vrot.slane %v27, 1
    %v61 = vrot.slane %v28, 1
    %v62 = vrot.slane %v29, 1
    %v63 = vrot.slane %v30, 1
    %vm64 = vcmp.lt.s32.totalorder %v38, 7
    %v65 = vsel %vm64, %v62, %v63
    %v66 = vsel %vm64, %v61, %v62
    %v67 = vsel %vm64, %v60, %v61
    %v68 = vsel %vm64, %v63, %v60
    %69 = vrot.lane.b32.xlu0 %v67, 112
    %v70 = vpop.permute.xlu0 %69
    %71 = vrot.lane.b32.xlu0 %v66, 112
    %v72 = vpop.permute.xlu0 %71
    %73 = vrot.lane.b32.xlu0 %v65, 112
    %v74 = vpop.permute.xlu0 %73
    %75 = vrot.lane.b32.xlu0 %v68, 112
    %v76 = vpop.permute.xlu0 %75
    %v77 = vadd.s32 %v32, 16
    %vm78 = vcmp.lt.s32.totalorder %v77, 128
    %v79 = vsel %vm78, %v53, %v70
    %v80 = vsel %vm78, %v55, %v72
    %v81 = vsel %vm78, %v57, %v74
    %v82 = vsel %vm78, %v59, %v76
    %v83 = vmax.f32 %v27, %v79
    %v84 = vmax.f32 %v28, %v80
    %v85 = vmax.f32 %v29, %v81
    %v86 = vmax.f32 %v30, %v82
    %s87 = scalar_lea.vmem [#allocation5], 32
    %88 = vst [vmem:[%s87] sm:$0xff] %v83
    %89 = vst [vmem:[%s87 + $0x8] sm:$0xff] %v84
    %90 = vst [vmem:[%s87 + $0x10] sm:$0xff] %v85
    %91 = vst [vmem:[%s87 + $0x18] sm:$0xff] %v86
    %92 = vrot.lane.b32.xlu0 %v27, 127
    %v93 = vpop.permute.xlu0 %92
    %94 = vrot.lane.b32.xlu0 %v28, 127
    %v95 = vpop.permute.xlu0 %94
    %96 = vrot.lane.b32.xlu0 %v29, 127
    %v97 = vpop.permute.xlu0 %96
    %98 = vrot.lane.b32.xlu0 %v30, 127
    %v99 = vpop.permute.xlu0 %98
    %100 = vrot.lane.b32.xlu0 %v67, 127
    %v101 = vpop.permute.xlu0 %100
    %102 = vrot.lane.b32.xlu0 %v66, 127
    %v103 = vpop.permute.xlu0 %102
    %104 = vrot.lane.b32.xlu0 %v65, 127
    %v105 = vpop.permute.xlu0 %104
    %106 = vrot.lane.b32.xlu0 %v68, 127
    %v107 = vpop.permute.xlu0 %106
    %v108 = vadd.s32 %v32, 1
    %vm109 = vcmp.lt.s32.totalorder %v108, 128
    %v110 = vsel %vm109, %v93, %v101
    %v111 = vsel %vm109, %v95, %v103
    %v112 = vsel %vm109, %v97, %v105
    %v113 = vsel %vm109, %v99, %v107
    %v114 = vmax.f32 %v27, %v110
    %v115 = vmax.f32 %v28, %v111
    %v116 = vmax.f32 %v29, %v112
    %v117 = vmax.f32 %v30, %v113
    %s118 = scalar_lea.vmem [#allocation5], 64
    %119 = vst [vmem:[%s118] sm:$0xff] %v114
    %120 = vst [vmem:[%s118 + $0x8] sm:$0xff] %v115
    %121 = vst [vmem:[%s118 + $0x10] sm:$0xff] %v116
    %122 = vst [vmem:[%s118 + $0x18] sm:$0xff] %v117
    %123 = vrot.lane.b32.xlu0 %v42, 112
    %v124 = vpop.permute.xlu0 %123
    %125 = vrot.lane.b32.xlu0 %v41, 112
    %v126 = vpop.permute.xlu0 %125
    %127 = vrot.lane.b32.xlu0 %v40, 112
    %v128 = vpop.permute.xlu0 %127
    %129 = vrot.lane.b32.xlu0 %v43, 112
    %v130 = vpop.permute.xlu0 %129
    %v131 = vrot.slane %v27, 3
    %v132 = vrot.slane %v28, 3
    %v133 = vrot.slane %v29, 3
    %v134 = vrot.slane %v30, 3
    %vm135 = vcmp.lt.s32.totalorder %v38, 5
    %v136 = vsel %vm135, %v133, %v134
    %v137 = vsel %vm135, %v132, %v133
    %v138 = vsel %vm135, %v131, %v132
    %v139 = vsel %vm135, %v134, %v131
    %140 = vrot.lane.b32.xlu0 %v138, 112
    %v141 = vpop.permute.xlu0 %140
    %142 = vrot.lane.b32.xlu0 %v137, 112
    %v143 = vpop.permute.xlu0 %142
    %144 = vrot.lane.b32.xlu0 %v136, 112
    %v145 = vpop.permute.xlu0 %144
    %146 = vrot.lane.b32.xlu0 %v139, 112
    %v147 = vpop.permute.xlu0 %146
    %v148 = vsel %vm78, %v124, %v141
    %v149 = vsel %vm78, %v126, %v143
    %v150 = vsel %vm78, %v128, %v145
    %v151 = vsel %vm78, %v130, %v147
    %v152 = vmax.f32 %v27, %v148
    %v153 = vmax.f32 %v28, %v149
    %v154 = vmax.f32 %v29, %v150
    %v155 = vmax.f32 %v30, %v151
    %s156 = scalar_lea.vmem [#allocation5], 96
    %157 = vst [vmem:[%s156] sm:$0xff] %v152
    %158 = vst [vmem:[%s156 + $0x8] sm:$0xff] %v153
    %159 = vst [vmem:[%s156 + $0x10] sm:$0xff] %v154
    %160 = vst [vmem:[%s156 + $0x18] sm:$0xff] %v155
    %161 = vrot.lane.b32.xlu0 %v42, 127
    %v162 = vpop.permute.xlu0 %161
    %163 = vrot.lane.b32.xlu0 %v41, 127
    %v164 = vpop.permute.xlu0 %163
    %165 = vrot.lane.b32.xlu0 %v40, 127
    %v166 = vpop.permute.xlu0 %165
    %167 = vrot.lane.b32.xlu0 %v43, 127
    %v168 = vpop.permute.xlu0 %167
    %169 = vrot.lane.b32.xlu0 %v138, 127
    %v170 = vpop.permute.xlu0 %169
    %171 = vrot.lane.b32.xlu0 %v137, 127
    %v172 = vpop.permute.xlu0 %171
    %173 = vrot.lane.b32.xlu0 %v136, 127
    %v174 = vpop.permute.xlu0 %173
    %175 = vrot.lane.b32.xlu0 %v139, 127
    %v176 = vpop.permute.xlu0 %175
    %v177 = vsel %vm109, %v162, %v170
    %v178 = vsel %vm109, %v164, %v172
    %v179 = vsel %vm109, %v166, %v174
    %v180 = vsel %vm109, %v168, %v176
    %v181 = vmax.f32 %v27, %v177
    %v182 = vmax.f32 %v28, %v178
    %v183 = vmax.f32 %v29, %v179
    %v184 = vmax.f32 %v30, %v180
    %s185 = scalar_lea.vmem [#allocation5], 128
    %186 = vst [vmem:[%s185] sm:$0xff] %v181
    %187 = vst [vmem:[%s185 + $0x8] sm:$0xff] %v182
    %188 = vst [vmem:[%s185 + $0x10] sm:$0xff] %v183
    %189 = vst [vmem:[%s185 + $0x18] sm:$0xff] %v184
    %190 = vrot.lane.b32.xlu0 %v27, 111
    %v191 = vpop.permute.xlu0 %190
    %192 = vrot.lane.b32.xlu0 %v28, 111
    %v193 = vpop.permute.xlu0 %192
    %194 = vrot.lane.b32.xlu0 %v29, 111
    %v195 = vpop.permute.xlu0 %194
    %196 = vrot.lane.b32.xlu0 %v30, 111
    %v197 = vpop.permute.xlu0 %196
    %198 = vrot.lane.b32.xlu0 %v67, 111
    %v199 = vpop.permute.xlu0 %198
    %200 = vrot.lane.b32.xlu0 %v66, 111
    %v201 = vpop.permute.xlu0 %200
    %202 = vrot.lane.b32.xlu0 %v65, 111
    %v203 = vpop.permute.xlu0 %202
    %204 = vrot.lane.b32.xlu0 %v68, 111
    %v205 = vpop.permute.xlu0 %204
    %v206 = vadd.s32 %v32, 17
    %vm207 = vcmp.lt.s32.totalorder %v206, 128
    %v208 = vsel %vm207, %v191, %v199
    %v209 = vsel %vm207, %v193, %v201
    %v210 = vsel %vm207, %v195, %v203
    %v211 = vsel %vm207, %v197, %v205
    %v212 = vmax.f32 %v27, %v208
    %v213 = vmax.f32 %v28, %v209
    %v214 = vmax.f32 %v29, %v210
    %v215 = vmax.f32 %v30, %v211
    %s216 = scalar_lea.vmem [#allocation5], 160
    %217 = vst [vmem:[%s216] sm:$0xff] %v212
    %218 = vst [vmem:[%s216 + $0x8] sm:$0xff] %v213
    %219 = vst [vmem:[%s216 + $0x10] sm:$0xff] %v214
    %220 = vst [vmem:[%s216 + $0x18] sm:$0xff] %v215
    %221 = vrot.lane.b32.xlu0 %v42, 111
    %v222 = vpop.permute.xlu0 %221
    %223 = vrot.lane.b32.xlu0 %v41, 111
    %v224 = vpop.permute.xlu0 %223
    %225 = vrot.lane.b32.xlu0 %v40, 111
    %v226 = vpop.permute.xlu0 %225
    %227 = vrot.lane.b32.xlu0 %v43, 111
    %v228 = vpop.permute.xlu0 %227
    %229 = vrot.lane.b32.xlu0 %v138, 111
    %v230 = vpop.permute.xlu0 %229
    %231 = vrot.lane.b32.xlu0 %v137, 111
    %v232 = vpop.permute.xlu0 %231
    %233 = vrot.lane.b32.xlu0 %v136, 111
    %v234 = vpop.permute.xlu0 %233
    %235 = vrot.lane.b32.xlu0 %v139, 111
    %v236 = vpop.permute.xlu0 %235
    %v237 = vsel %vm207, %v222, %v230
    %v238 = vsel %vm207, %v224, %v232
    %v239 = vsel %vm207, %v226, %v234
    %v240 = vsel %vm207, %v228, %v236
    %v241 = vmax.f32 %v27, %v237
    %v242 = vmax.f32 %v28, %v238
    %v243 = vmax.f32 %v29, %v239
    %v244 = vmax.f32 %v30, %v240
    %s245 = scalar_lea.vmem [#allocation5], 192
    %246 = vst [vmem:[%s245] sm:$0xff] %v241
    %247 = vst [vmem:[%s245 + $0x8] sm:$0xff] %v242
    %248 = vst [vmem:[%s245 + $0x10] sm:$0xff] %v243
    %249 = vst [vmem:[%s245 + $0x18] sm:$0xff] %v244
    // Predicated region
    $region10: #{tpu_custom_call.1} parent=1 // pred_check
      _
    $region11: #{tpu_custom_call.1} parent=1 // pred_check_branch
      %251 = sbr.rel (0) target = $region13
    $region12: #{tpu_custom_call.1} parent=1 // pred_region
      %s253 = ssub.s32 3584, 3584
      %254 = vsyncadd [#allocation4], %s253
      %s255 = sshll.u32 [#allocation5], 4
      %s256 = int_to_ptr.vmem [resolvable:$true] %s255
      %261 = dma.vmem_to_hbm [thread:$0]  %s256, 3584, %s1, [#allocation4], 128, 128, 8
    $region13: #{tpu_custom_call.1} parent=1 // pred_fallthru
      _
    // Predicated region
    $region14: #{tpu_custom_call.1} parent=1 // pred_check
      _
    $region15: #{tpu_custom_call.1} parent=1 // pred_check_branch
      %263 = sbr.rel (0) target = $region17
    $region16: #{tpu_custom_call.1} parent=1 // pred_region
      %264 = dma.done [#allocation4], 3584
    $region17: #{tpu_custom_call.1} parent=1 // pred_fallthru
      _
    %265 = vsyncpa [#allocation3], 1
    %266 = vsyncpa [#allocation4], 1

</llo_original>
